<compile_context>
chip_gen: v7x
topology: tpu7x:2x2x1
jax: 0.10.0
libtpu: 0.0.40
codegen_flags: <defaults>
</compile_context>

<pallas_src>
import functools

import jax
import jax.numpy as jnp
from jax.experimental import pallas as pl
from jax.experimental.pallas import tpu as pltpu


def _round_up(x: int, m: int) -> int:
    return ((x + m - 1) // m) * m


def _rigid_frame_kernel(x_ref, m_ref, w1_ref, b1_ref, w2_ref, b2_ref, o_ref,
                        *, groups):
    G = groups
    x = x_ref[...]                                  # [TMg, G*E] bf16
    m = m_ref[...].astype(jnp.float32)              # [G, TMg]  (rows -> lanes)

    # ---- fused layer 1 (block-diagonal): h = W1bd^T @ x^T -> [G*2H, TMg] ----
    h = jax.lax.dot_general(
        w1_ref[...], x,
        dimension_numbers=(((1,), (1,)), ((), ())),  # contract on G*E for both
        preferred_element_type=jnp.float32)
    h = jnp.maximum(h + b1_ref[...], 0.0).astype(jnp.bfloat16)

    # ---- fused layer 2 (block-diagonal): [9*G, TMg], comp-major rows c*G+j ----
    out9 = jnp.dot(w2_ref[...], h, preferred_element_type=jnp.float32)
    out9 = out9 + b2_ref[...]

    def slab(c):                                     # component c, all G groups
        return out9[c * G:(c + 1) * G, :] * m        # mask applied pre-GS (as in ref)

    c0, c1, c2 = slab(0), slab(1), slab(2)           # coords / trans
    x0, x1, x2 = slab(3), slab(4), slab(5)           # x basis (raw)
    y0, y1, y2 = slab(6), slab(7), slab(8)           # y basis (raw)

    # ---- Gram-Schmidt + cross product in f32 on [G, TMg] slabs ----
    eps2 = jnp.float32(1e-24)                        # (F.normalize eps)^2
    inv_nx = jax.lax.rsqrt(jnp.maximum(x0 * x0 + x1 * x1 + x2 * x2, eps2))
    xn0, xn1, xn2 = x0 * inv_nx, x1 * inv_nx, x2 * inv_nx

    proj = y0 * xn0 + y1 * xn1 + y2 * xn2
    yo0, yo1, yo2 = y0 - proj * xn0, y1 - proj * xn1, y2 - proj * xn2
    inv_ny = jax.lax.rsqrt(jnp.maximum(yo0 * yo0 + yo1 * yo1 + yo2 * yo2, eps2))
    yb0, yb1, yb2 = yo0 * inv_ny, yo1 * inv_ny, yo2 * inv_ny

    z0 = xn1 * yb2 - xn2 * yb1
    z1 = xn2 * yb0 - xn0 * yb2
    z2 = xn0 * yb1 - xn1 * yb0

    # one lane-dense block store: rows (comp c, group j) = c*G + j
    out = jnp.concatenate(
        [c0, c1, c2, xn0, xn1, xn2, yb0, yb1, yb2, z0, z1, z2], axis=0)
    o_ref[...] = out.astype(o_ref.dtype)


def rigid_frame_initializer(embeddings, params, mask=None, *,
                            tile_lanes=256, pack=None):
    """Returns (rot_mats [B,S,3,3], trans [B,S,3], initial_coords [B,S,3])."""
    B, S, E = embeddings.shape
    N = B * S
    w1c, b1c, w2c, b2c, w1o, b1o, w2o, b2o = params
    H = w1c.shape[1]
    H2 = 2 * H

    if pack is None:
        # Fill a 256-wide MXU contraction (v6e / v7x).  On v5e, pack such that
        # G*E == 128 is already optimal, but 256 only costs an extra MXU pass.
        pack = max(1, min(8, 256 // max(E, H2)))
    G = pack

    # ---- fuse the two branches, then build G-way block-diagonal weights ----
    w1_cat = jnp.concatenate([w1c, w1o], axis=1).astype(jnp.float32)   # [E, 2H]
    b1_cat = jnp.concatenate([b1c, b1o], axis=0).astype(jnp.float32)   # [2H]
    w2_cat = jnp.zeros((H2, 9), jnp.float32)
    w2_cat = w2_cat.at[:H, 0:3].set(w2c.astype(jnp.float32))
    w2_cat = w2_cat.at[H:, 3:9].set(w2o.astype(jnp.float32))           # [2H, 9]
    b2_cat = jnp.concatenate([b2c, b2o], axis=0).astype(jnp.float32)   # [9]

    eye = jnp.eye(G, dtype=jnp.float32)
    # W1bd^T[(j,m), (l,e)] = W1[e, m] * (j == l)   -> [G*2H, G*E]
    w1bd_t = jnp.einsum('me,jl->jmle', w1_cat.T, eye).reshape(G * H2, G * E)
    # W2bd^T[(c,j), (l,k)] = W2[k, c] * (j == l)   -> [9*G, G*2H]  (comp-major)
    w2bd_t = jnp.einsum('ck,jl->cjlk', w2_cat.T, eye).reshape(9 * G, G * H2)
    w1bd_t = w1bd_t.astype(jnp.bfloat16)
    w2bd_t = w2bd_t.astype(jnp.bfloat16)
    b1bd = jnp.tile(b1_cat, G).reshape(G * H2, 1)        # index (j,m) -> b1[m]
    b2bd = jnp.repeat(b2_cat, G).reshape(9 * G, 1)       # index (c,j) -> b2[c]

    if mask is None:
        mask = jnp.ones((B, S), dtype=bool)

    # ---- tiling: packed groups on the lane axis ----
    assert tile_lanes % 128 == 0, "tile_lanes must be a multiple of 128"
    n_pack = -(-N // G)
    tmg = min(tile_lanes, _round_up(n_pack, 8))
    if n_pack >= 8 * 128:
        # keep >= ~8 grid steps so v7x can shard across 2 TCs and pipeline
        tmg = min(tmg, _round_up(-(-n_pack // 8), 128))
    ng_pad = _round_up(n_pack, tmg)
    n_rows_pad = ng_pad * G

    # bf16 matmul operands; cast is a no-op when embeddings are already bf16
    x = embeddings.reshape(N, E).astype(jnp.bfloat16)
    mf = mask.reshape(N).astype(jnp.bfloat16)
    if n_rows_pad != N:                      # pad only for ragged row counts
        x = jnp.pad(x, ((0, n_rows_pad - N), (0, 0)))
        mf = jnp.pad(mf, (0, n_rows_pad - N))
    x_p = x.reshape(ng_pad, G * E)           # free, contiguous reshape
    m_g = mf.reshape(ng_pad, G).T            # [G, ng_pad], m_g[j, i] = mask[i*G+j]

    grid = (ng_pad // tmg,)
    kernel = functools.partial(_rigid_frame_kernel, groups=G)

    out = pl.pallas_call(
        kernel,
        out_shape=jax.ShapeDtypeStruct((12 * G, ng_pad), embeddings.dtype),
        grid=grid,
        in_specs=[
            pl.BlockSpec((tmg, G * E), lambda i: (i, 0)),      # packed x tile
            pl.BlockSpec((G, tmg), lambda i: (0, i)),          # mask tile
            pl.BlockSpec((G * H2, G * E), lambda i: (0, 0)),   # layer-1 weight^T
            pl.BlockSpec((G * H2, 1), lambda i: (0, 0)),       # layer-1 bias
            pl.BlockSpec((9 * G, G * H2), lambda i: (0, 0)),   # layer-2 weight^T
            pl.BlockSpec((9 * G, 1), lambda i: (0, 0)),        # layer-2 bias
        ],
        out_specs=pl.BlockSpec((12 * G, tmg), lambda i: (0, i)),
        compiler_params=pltpu.CompilerParams(dimension_semantics=("parallel",)),
    )(x_p, m_g, w1bd_t, b1bd, w2bd_t, b2bd)

    # unscramble [12*G, ng_pad] (comp-major rows) -> [N, 12]; output is only
    # 12 values/row so this pass is small relative to the input read.
    out = out.reshape(12, G, ng_pad)
    out = jnp.transpose(out, (2, 1, 0)).reshape(n_rows_pad, 12)[:N]
    initial_coords = out[:, 0:3].reshape(B, S, 3)
    rot_mats = out[:, 3:12].reshape(B, S, 3, 3)
    trans = initial_coords                                   # Rigid(rots, trans)
    return rot_mats, trans, initial_coords


def _reference(embeddings, params, mask=None):
    """Pure-JAX reference mirroring the PyTorch forward (bf16 matmuls, f32 GS)."""
    B, S, E = embeddings.shape
    if mask is None:
        mask = jnp.ones((B, S), dtype=bool)
    w1c, b1c, w2c, b2c, w1o, b1o, w2o, b2o = params
    mf = mask.astype(jnp.float32)[..., None]
    x = embeddings.astype(jnp.bfloat16)

    def mlp(w1, b1, w2, b2):
        h = jnp.dot(x, w1.astype(jnp.bfloat16), preferred_element_type=jnp.float32)
        h = jnp.maximum(h + b1.astype(jnp.float32), 0.0).astype(jnp.bfloat16)
        o = jnp.dot(h, w2.astype(jnp.bfloat16), preferred_element_type=jnp.float32)
        return o + b2.astype(jnp.float32)

    coords = mlp(w1c, b1c, w2c, b2c) * mf
    rot6 = mlp(w1o, b1o, w2o, b2o) * mf
    xb, yr = rot6[..., :3], rot6[..., 3:]
    eps = 1e-12
    xn = xb / jnp.maximum(jnp.linalg.norm(xb, axis=-1, keepdims=True), eps)
    yo = yr - jnp.sum(yr * xn, axis=-1, keepdims=True) * xn
    yb = yo / jnp.maximum(jnp.linalg.norm(yo, axis=-1, keepdims=True), eps)
    zb = jnp.cross(xn, yb)
    rot_mats = jnp.stack([xn, yb, zb], axis=-2)
    return rot_mats, coords, coords


def _init_params(key, embed_dim, hidden_dim):
    """Deterministic synthetic parameters (weights stored [in, out])."""
    ks = jax.random.split(key, 8)
    sc1 = 1.0 / jnp.sqrt(embed_dim)
    sc2 = 1.0 / jnp.sqrt(hidden_dim)
    w1c = jax.random.normal(ks[0], (embed_dim, hidden_dim), jnp.float32) * sc1
    b1c = jax.random.normal(ks[1], (hidden_dim,), jnp.float32) * 0.1
    w2c = jax.random.normal(ks[2], (hidden_dim, 3), jnp.float32) * sc2
    b2c = jax.random.normal(ks[3], (3,), jnp.float32) * 0.1
    w1o = jax.random.normal(ks[4], (embed_dim, hidden_dim), jnp.float32) * sc1
    b1o = jax.random.normal(ks[5], (hidden_dim,), jnp.float32) * 0.1
    w2o = jax.random.normal(ks[6], (hidden_dim, 6), jnp.float32) * sc2
    b2o = jax.random.normal(ks[7], (6,), jnp.float32) * 0.1
    return (w1c, b1c, w2c, b2c, w1o, b1o, w2o, b2o)


if __name__ == "__main__":
    key = jax.random.PRNGKey(0)

    # (2, 8, f32): N is a multiple of the pack factor; (1, 10, bf16): exercises
    # ragged-row padding and the bf16 in/out path.
    for (B, S, E, emb_dtype) in [(2, 8, 32, jnp.float32), (1, 10, 32, jnp.bfloat16)]:
        H = E // 2  # hidden_dim default = embed_dim // 2
        k_emb, k_mask, k_par, key = jax.random.split(key, 4)
        embeddings = jax.random.normal(k_emb, (B, S, E), jnp.float32).astype(emb_dtype)
        mask = jax.random.bernoulli(k_mask, p=0.8, shape=(B, S))
        params = _init_params(k_par, E, H)

        rot_mats, trans, coords = rigid_frame_initializer(embeddings, params, mask)
        jax.block_until_ready((rot_mats, trans, coords))

        ref_rot, ref_trans, ref_coords = _reference(embeddings, params, mask)
        tol = 2e-2  # bf16 matmul operands + (possibly) bf16 output
        assert jnp.allclose(coords.astype(jnp.float32), ref_coords, atol=tol, rtol=tol)
        assert jnp.allclose(trans.astype(jnp.float32), ref_trans, atol=tol, rtol=tol)
        assert jnp.allclose(rot_mats.astype(jnp.float32), ref_rot, atol=tol, rtol=tol)

    print("KERNEL_OK")
</pallas_src>

<mosaic_0001>
module attributes {stable_mosaic.version = 11 : i64} {
  func.func @_rigid_frame_kernel(%arg0: i32, %arg1: memref<8x256xbf16, #tpu.memory_space<vmem>>, %arg2: memref<8x8xbf16, #tpu.memory_space<vmem>>, %arg3: memref<256x256xbf16, #tpu.memory_space<vmem>>, %arg4: memref<256x1xf32, #tpu.memory_space<vmem>>, %arg5: memref<72x256xbf16, #tpu.memory_space<vmem>>, %arg6: memref<72x1xf32, #tpu.memory_space<vmem>>, %arg7: memref<96x8xf32, #tpu.memory_space<vmem>>) attributes {dimension_semantics = [#tpu.dimension_semantics<parallel>], iteration_bounds = array<i64: 1>, scalar_prefetch = 0 : i64, scratch_operands = 0 : i64, tpu.core_type = #tpu.core_type<tc>, window_params = [{transform_indices = @transform_0, window_bounds = array<i64: 8, 256>}, {transform_indices = @transform_1, window_bounds = array<i64: 8, 8>}, {pipeline_mode = #tpu.pipeline_mode<synchronous>, transform_indices = @transform_2, window_bounds = array<i64: 256, 256>}, {pipeline_mode = #tpu.pipeline_mode<synchronous>, transform_indices = @transform_3, window_bounds = array<i64: 256, 1>}, {pipeline_mode = #tpu.pipeline_mode<synchronous>, transform_indices = @transform_4, window_bounds = array<i64: 72, 256>}, {pipeline_mode = #tpu.pipeline_mode<synchronous>, transform_indices = @transform_5, window_bounds = array<i64: 72, 1>}, {transform_indices = @transform_6, window_bounds = array<i64: 96, 8>}]} {
    %c0 = arith.constant 0 : index
    %c0_0 = arith.constant 0 : index
    %0 = vector.load %arg1[%c0, %c0_0] : memref<8x256xbf16, #tpu.memory_space<vmem>>, vector<8x256xbf16>
    %c0_1 = arith.constant 0 : index
    %c0_2 = arith.constant 0 : index
    %1 = vector.load %arg2[%c0_1, %c0_2] : memref<8x8xbf16, #tpu.memory_space<vmem>>, vector<8x8xbf16>
    %2 = arith.extf %1 : vector<8x8xbf16> to vector<8x8xf32>
    %c0_3 = arith.constant 0 : index
    %c0_4 = arith.constant 0 : index
    %3 = vector.load %arg3[%c0_3, %c0_4] : memref<256x256xbf16, #tpu.memory_space<vmem>>, vector<256x256xbf16>
    %cst = arith.constant dense<0.000000e+00> : vector<256x8xf32>
    %4 = tpu.matmul %3, %0, %cst {dimension_numbers = #tpu.dot_dimension_numbers<[1], [1], [0], [0], [0, 0, 1, 0], [], []>} : vector<256x256xbf16>, vector<8x256xbf16>, vector<256x8xf32> -> vector<256x8xf32>
    %c0_5 = arith.constant 0 : index
    %c0_6 = arith.constant 0 : index
    %5 = vector.load %arg4[%c0_5, %c0_6] : memref<256x1xf32, #tpu.memory_space<vmem>>, vector<256x1xf32>
    %6 = vector.broadcast %5 : vector<256x1xf32> to vector<256x8xf32>
    %7 = arith.addf %4, %6 : vector<256x8xf32>
    %cst_7 = arith.constant 0.000000e+00 : f32
    %8 = vector.broadcast %cst_7 : f32 to vector<256x8xf32>
    %9 = arith.maximumf %7, %8 : vector<256x8xf32>
    %10 = arith.truncf %9 : vector<256x8xf32> to vector<256x8xbf16>
    %c0_8 = arith.constant 0 : index
    %c0_9 = arith.constant 0 : index
    %11 = vector.load %arg5[%c0_8, %c0_9] : memref<72x256xbf16, #tpu.memory_space<vmem>>, vector<72x256xbf16>
    %cst_10 = arith.constant dense<0.000000e+00> : vector<72x8xf32>
    %12 = tpu.matmul %11, %10, %cst_10 {dimension_numbers = #tpu.dot_dimension_numbers<[1], [0], [0], [1], [0, 0, 1, 1], [], []>} : vector<72x256xbf16>, vector<256x8xbf16>, vector<72x8xf32> -> vector<72x8xf32>
    %c0_11 = arith.constant 0 : index
    %c0_12 = arith.constant 0 : index
    %13 = vector.load %arg6[%c0_11, %c0_12] : memref<72x1xf32, #tpu.memory_space<vmem>>, vector<72x1xf32>
    %14 = vector.broadcast %13 : vector<72x1xf32> to vector<72x8xf32>
    %15 = arith.addf %12, %14 : vector<72x8xf32>
    %16 = vector.extract_strided_slice %15 {offsets = [0, 0], sizes = [8, 8], strides = [1, 1]} : vector<72x8xf32> to vector<8x8xf32>
    %17 = arith.mulf %16, %2 : vector<8x8xf32>
    %18 = vector.extract_strided_slice %15 {offsets = [8, 0], sizes = [8, 8], strides = [1, 1]} : vector<72x8xf32> to vector<8x8xf32>
    %19 = arith.mulf %18, %2 : vector<8x8xf32>
    %20 = vector.extract_strided_slice %15 {offsets = [16, 0], sizes = [8, 8], strides = [1, 1]} : vector<72x8xf32> to vector<8x8xf32>
    %21 = arith.mulf %20, %2 : vector<8x8xf32>
    %22 = vector.extract_strided_slice %15 {offsets = [24, 0], sizes = [8, 8], strides = [1, 1]} : vector<72x8xf32> to vector<8x8xf32>
    %23 = arith.mulf %22, %2 : vector<8x8xf32>
    %24 = vector.extract_strided_slice %15 {offsets = [32, 0], sizes = [8, 8], strides = [1, 1]} : vector<72x8xf32> to vector<8x8xf32>
    %25 = arith.mulf %24, %2 : vector<8x8xf32>
    %26 = vector.extract_strided_slice %15 {offsets = [40, 0], sizes = [8, 8], strides = [1, 1]} : vector<72x8xf32> to vector<8x8xf32>
    %27 = arith.mulf %26, %2 : vector<8x8xf32>
    %28 = vector.extract_strided_slice %15 {offsets = [48, 0], sizes = [8, 8], strides = [1, 1]} : vector<72x8xf32> to vector<8x8xf32>
    %29 = arith.mulf %28, %2 : vector<8x8xf32>
    %30 = vector.extract_strided_slice %15 {offsets = [56, 0], sizes = [8, 8], strides = [1, 1]} : vector<72x8xf32> to vector<8x8xf32>
    %31 = arith.mulf %30, %2 : vector<8x8xf32>
    %32 = vector.extract_strided_slice %15 {offsets = [64, 0], sizes = [8, 8], strides = [1, 1]} : vector<72x8xf32> to vector<8x8xf32>
    %33 = arith.mulf %32, %2 : vector<8x8xf32>
    %34 = arith.mulf %23, %23 : vector<8x8xf32>
    %35 = arith.mulf %25, %25 : vector<8x8xf32>
    %36 = arith.addf %34, %35 : vector<8x8xf32>
    %37 = arith.mulf %27, %27 : vector<8x8xf32>
    %38 = arith.addf %36, %37 : vector<8x8xf32>
    %cst_13 = arith.constant 1.000000e-24 : f32
    %39 = vector.broadcast %cst_13 : f32 to vector<8x8xf32>
    %40 = arith.maximumf %38, %39 : vector<8x8xf32>
    %41 = math.rsqrt %40 : vector<8x8xf32>
    %42 = arith.mulf %23, %41 : vector<8x8xf32>
    %43 = arith.mulf %25, %41 : vector<8x8xf32>
    %44 = arith.mulf %27, %41 : vector<8x8xf32>
    %45 = arith.mulf %29, %42 : vector<8x8xf32>
    %46 = arith.mulf %31, %43 : vector<8x8xf32>
    %47 = arith.addf %45, %46 : vector<8x8xf32>
    %48 = arith.mulf %33, %44 : vector<8x8xf32>
    %49 = arith.addf %47, %48 : vector<8x8xf32>
    %50 = arith.mulf %49, %42 : vector<8x8xf32>
    %51 = arith.subf %29, %50 : vector<8x8xf32>
    %52 = arith.mulf %49, %43 : vector<8x8xf32>
    %53 = arith.subf %31, %52 : vector<8x8xf32>
    %54 = arith.mulf %49, %44 : vector<8x8xf32>
    %55 = arith.subf %33, %54 : vector<8x8xf32>
    %56 = arith.mulf %51, %51 : vector<8x8xf32>
    %57 = arith.mulf %53, %53 : vector<8x8xf32>
    %58 = arith.addf %56, %57 : vector<8x8xf32>
    %59 = arith.mulf %55, %55 : vector<8x8xf32>
    %60 = arith.addf %58, %59 : vector<8x8xf32>
    %cst_14 = arith.constant 1.000000e-24 : f32
    %61 = vector.broadcast %cst_14 : f32 to vector<8x8xf32>
    %62 = arith.maximumf %60, %61 : vector<8x8xf32>
    %63 = math.rsqrt %62 : vector<8x8xf32>
    %64 = arith.mulf %51, %63 : vector<8x8xf32>
    %65 = arith.mulf %53, %63 : vector<8x8xf32>
    %66 = arith.mulf %55, %63 : vector<8x8xf32>
    %67 = arith.mulf %43, %66 : vector<8x8xf32>
    %68 = arith.mulf %44, %65 : vector<8x8xf32>
    %69 = arith.subf %67, %68 : vector<8x8xf32>
    %70 = arith.mulf %44, %64 : vector<8x8xf32>
    %71 = arith.mulf %42, %66 : vector<8x8xf32>
    %72 = arith.subf %70, %71 : vector<8x8xf32>
    %73 = arith.mulf %42, %65 : vector<8x8xf32>
    %74 = arith.mulf %43, %64 : vector<8x8xf32>
    %75 = arith.subf %73, %74 : vector<8x8xf32>
    %76 = tpu.concatenate %17, %19, %21, %42, %43, %44, %64, %65, %66, %69, %72, %75 in 0 : vector<8x8xf32>, vector<8x8xf32>, vector<8x8xf32>, vector<8x8xf32>, vector<8x8xf32>, vector<8x8xf32>, vector<8x8xf32>, vector<8x8xf32>, vector<8x8xf32>, vector<8x8xf32>, vector<8x8xf32>, vector<8x8xf32> -> vector<96x8xf32>
    %c0_15 = arith.constant 0 : index
    %c0_16 = arith.constant 0 : index
    %77 = vector.load %arg7[%c0_15, %c0_16] : memref<96x8xf32, #tpu.memory_space<vmem>>, vector<96x8xf32>
    tpu.vector_store %arg7[%c0_15, %c0_16], %76 {strides = array<i32>} : memref<96x8xf32, #tpu.memory_space<vmem>>, vector<96x8xf32>,
    return
  }
  func.func @transform_0(%arg0: i32) -> (i32, i32) {
    %c0_i32 = arith.constant 0 : i32
    %c0_i32_0 = arith.constant 0 : i32
    return %arg0, %c0_i32 : i32, i32
  }
  func.func @transform_1(%arg0: i32) -> (i32, i32) {
    %c0_i32 = arith.constant 0 : i32
    %c0_i32_0 = arith.constant 0 : i32
    return %c0_i32, %arg0 : i32, i32
  }
  func.func @transform_2(%arg0: i32) -> (i32, i32) {
    %c0_i32 = arith.constant 0 : i32
    %c0_i32_0 = arith.constant 0 : i32
    %c0_i32_1 = arith.constant 0 : i32
    return %c0_i32, %c0_i32_0 : i32, i32
  }
  func.func @transform_3(%arg0: i32) -> (i32, i32) {
    %c0_i32 = arith.constant 0 : i32
    %c0_i32_0 = arith.constant 0 : i32
    %c0_i32_1 = arith.constant 0 : i32
    return %c0_i32, %c0_i32_0 : i32, i32
  }
  func.func @transform_4(%arg0: i32) -> (i32, i32) {
    %c0_i32 = arith.constant 0 : i32
    %c0_i32_0 = arith.constant 0 : i32
    %c0_i32_1 = arith.constant 0 : i32
    return %c0_i32, %c0_i32_0 : i32, i32
  }
  func.func @transform_5(%arg0: i32) -> (i32, i32) {
    %c0_i32 = arith.constant 0 : i32
    %c0_i32_0 = arith.constant 0 : i32
    %c0_i32_1 = arith.constant 0 : i32
    return %c0_i32, %c0_i32_0 : i32, i32
  }
  func.func @transform_6(%arg0: i32) -> (i32, i32) {
    %c0_i32 = arith.constant 0 : i32
    %c0_i32_0 = arith.constant 0 : i32
    return %c0_i32, %arg0 : i32, i32
  }
}

</mosaic_0001>

<llo_original>
// kernel: tpu_custom_call.1
$region0: #{tpu_custom_call.1}
  #allocation0 [shape = 'u32[]', space=smem, size = 0x4, offset = 0x4, fixed_abs, tag = 'smem constant byte address 0x4 - core index']
  #allocation1 [shape = 'u32[144,128]{1,0:T(1,128)}', space=vmem, size = 0x12000, scoped, tag = 'internal scratch']
  %s0 = inlined_call_operand.vmem [shape: bf16[8,256], index: 0, kind: input, shape index: {}]
  %s1 = inlined_call_operand.hbm [shape: bf16[8,8], index: 1, kind: input, shape index: {}]
  %s2 = inlined_call_operand.vmem [shape: bf16[256,256], index: 2, kind: input, shape index: {}]
  %s3 = inlined_call_operand.vmem [shape: f32[256,1], index: 3, kind: input, shape index: {}]
  %s4 = inlined_call_operand.vmem [shape: bf16[72,256], index: 4, kind: input, shape index: {}]
  %s5 = inlined_call_operand.vmem [shape: f32[72,1], index: 5, kind: input, shape index: {}]
  %s6 = inlined_call_operand.vmem [shape: f32[96,8], index: 6, kind: output, shape index: {}]
  %s7 = sld [smem:[#allocation0]]
  $region38: #{tpu_custom_call.1} parent=0
    _
  %s9 = ssub.s32 1, %s7
  %s10 = scalar_select 0, %s9, %s7
  $region1: #{tpu_custom_call.1} parent=0
    #allocation2 [shape = 'u8[2048]{0}', space=vmem, size = 0x800, scoped, tag = 'input window, operand 1, single buffered']
    #allocation3 [shape = 's32[1]{0}', space=sflag, size = 0x4, scoped, tag = 'scoped memory for tpu_custom_call.1']
    %11 = vsyncpa [#allocation3], 0
    // Predicated region
    $region2: #{tpu_custom_call.1} parent=1 // pred_check
      _
    $region3: #{tpu_custom_call.1} parent=1 // pred_check_branch
      %13 = sbr.rel (0) target = $region5
    $region4: #{tpu_custom_call.1} parent=1 // pred_region
      _
    $region5: #{tpu_custom_call.1} parent=1 // pred_fallthru
      _
    // Predicated region
    $region6: #{tpu_custom_call.1} parent=1 // pred_check
      _
    $region7: #{tpu_custom_call.1} parent=1 // pred_check_branch
      %15 = sbr.rel (0) target = $region9
    $region8: #{tpu_custom_call.1} parent=1 // pred_region
      %s17 = ssub.s32 64, 64
      %18 = vsyncadd [#allocation3], %s17
      %s20 = sshll.u32 [#allocation2], 4
      %s21 = int_to_ptr.vmem [resolvable:$true] %s20
      %23 = dma.hbm_to_vmem [thread:$0]  %s1, 64, %s21, [#allocation3]
    $region9: #{tpu_custom_call.1} parent=1 // pred_fallthru
      _
    // Predicated region
    $region10: #{tpu_custom_call.1} parent=1 // pred_check
      _
    $region11: #{tpu_custom_call.1} parent=1 // pred_check_branch
      %25 = sbr.rel (0) target = $region13
    $region12: #{tpu_custom_call.1} parent=1 // pred_region
      _
    $region13: #{tpu_custom_call.1} parent=1 // pred_fallthru
      _
    // Predicated region
    $region14: #{tpu_custom_call.1} parent=1 // pred_check
      _
    $region15: #{tpu_custom_call.1} parent=1 // pred_check_branch
      %27 = sbr.rel (0) target = $region17
    $region16: #{tpu_custom_call.1} parent=1 // pred_region
      _
    $region17: #{tpu_custom_call.1} parent=1 // pred_fallthru
      _
    // Predicated region
    $region18: #{tpu_custom_call.1} parent=1 // pred_check
      _
    $region19: #{tpu_custom_call.1} parent=1 // pred_check_branch
      %29 = sbr.rel (0) target = $region21
    $region20: #{tpu_custom_call.1} parent=1 // pred_region
      _
    $region21: #{tpu_custom_call.1} parent=1 // pred_fallthru
      _
    // Predicated region
    $region22: #{tpu_custom_call.1} parent=1 // pred_check
      _
    $region23: #{tpu_custom_call.1} parent=1 // pred_check_branch
      %31 = sbr.rel (0) target = $region25
    $region24: #{tpu_custom_call.1} parent=1 // pred_region
      _
    $region25: #{tpu_custom_call.1} parent=1 // pred_fallthru
      _
    // Predicated region
    $region26: #{tpu_custom_call.1} parent=1 // pred_check
      _
    $region27: #{tpu_custom_call.1} parent=1 // pred_check_branch
      %33 = sbr.rel (0) target = $region29
    $region28: #{tpu_custom_call.1} parent=1 // pred_region
      %34 = dma.done [#allocation3], 64
    $region29: #{tpu_custom_call.1} parent=1 // pred_fallthru
      _
    %v36 = vld [vmem:[%s0] sm:$0xff]
    %v37 = vld [vmem:[#allocation2] sm:$0xf]
    %v38 = vunpack.c.l.bf16 %v37
    %v39 = vld [vmem:[%s2] sm:$0xff]
    %v40 = vld [vmem:[%s2 + $0x8] sm:$0xff]
    %v41 = vld [vmem:[%s2 + $0x10] sm:$0xff]
    %v42 = vld [vmem:[%s2 + $0x18] sm:$0xff]
    %v43 = vld [vmem:[%s2 + $0x20] sm:$0xff]
    %v44 = vld [vmem:[%s2 + $0x28] sm:$0xff]
    %v45 = vld [vmem:[%s2 + $0x30] sm:$0xff]
    %v46 = vld [vmem:[%s2 + $0x38] sm:$0xff]
    %v47 = vld [vmem:[%s2 + $0x40] sm:$0xff]
    %v48 = vld [vmem:[%s2 + $0x48] sm:$0xff]
    %v49 = vld [vmem:[%s2 + $0x50] sm:$0xff]
    %v50 = vld [vmem:[%s2 + $0x58] sm:$0xff]
    %v51 = vld [vmem:[%s2 + $0x60] sm:$0xff]
    %v52 = vld [vmem:[%s2 + $0x68] sm:$0xff]
    %v53 = vld [vmem:[%s2 + $0x70] sm:$0xff]
    %v54 = vld [vmem:[%s2 + $0x78] sm:$0xff]
    %v55 = vld [vmem:[%s2 + $0x80] sm:$0xff]
    %v56 = vld [vmem:[%s2 + $0x88] sm:$0xff]
    %v57 = vld [vmem:[%s2 + $0x90] sm:$0xff]
    %v58 = vld [vmem:[%s2 + $0x98] sm:$0xff]
    %v59 = vld [vmem:[%s2 + $0xa0] sm:$0xff]
    %v60 = vld [vmem:[%s2 + $0xa8] sm:$0xff]
    %v61 = vld [vmem:[%s2 + $0xb0] sm:$0xff]
    %v62 = vld [vmem:[%s2 + $0xb8] sm:$0xff]
    %v63 = vld [vmem:[%s2 + $0xc0] sm:$0xff]
    %v64 = vld [vmem:[%s2 + $0xc8] sm:$0xff]
    %v65 = vld [vmem:[%s2 + $0xd0] sm:$0xff]
    %v66 = vld [vmem:[%s2 + $0xd8] sm:$0xff]
    %v67 = vld [vmem:[%s2 + $0xe0] sm:$0xff]
    %v68 = vld [vmem:[%s2 + $0xe8] sm:$0xff]
    %v69 = vld [vmem:[%s2 + $0xf0] sm:$0xff]
    %v70 = vld [vmem:[%s2 + $0xf8] sm:$0xff]
    %v71 = vld [vmem:[%s3] sm:$0xff]
    %v72 = vld [vmem:[%s3 + $0x8] sm:$0xff]
    %v73 = vld [vmem:[%s3 + $0x10] sm:$0xff]
    %v74 = vld [vmem:[%s3 + $0x18] sm:$0xff]
    %v75 = vld [vmem:[%s3 + $0x20] sm:$0xff]
    %v76 = vld [vmem:[%s3 + $0x28] sm:$0xff]
    %v77 = vld [vmem:[%s3 + $0x30] sm:$0xff]
    %v78 = vld [vmem:[%s3 + $0x38] sm:$0xff]
    %v79 = vld [vmem:[%s3 + $0x40] sm:$0xff]
    %v80 = vld [vmem:[%s3 + $0x48] sm:$0xff]
    %v81 = vld [vmem:[%s3 + $0x50] sm:$0xff]
    %v82 = vld [vmem:[%s3 + $0x58] sm:$0xff]
    %v83 = vld [vmem:[%s3 + $0x60] sm:$0xff]
    %v84 = vld [vmem:[%s3 + $0x68] sm:$0xff]
    %v85 = vld [vmem:[%s3 + $0x70] sm:$0xff]
    %v86 = vld [vmem:[%s3 + $0x78] sm:$0xff]
    %v87 = vld [vmem:[%s3 + $0x80] sm:$0xff]
    %v88 = vld [vmem:[%s3 + $0x88] sm:$0xff]
    %v89 = vld [vmem:[%s3 + $0x90] sm:$0xff]
    %v90 = vld [vmem:[%s3 + $0x98] sm:$0xff]
    %v91 = vld [vmem:[%s3 + $0xa0] sm:$0xff]
    %v92 = vld [vmem:[%s3 + $0xa8] sm:$0xff]
    %v93 = vld [vmem:[%s3 + $0xb0] sm:$0xff]
    %v94 = vld [vmem:[%s3 + $0xb8] sm:$0xff]
    %v95 = vld [vmem:[%s3 + $0xc0] sm:$0xff]
    %v96 = vld [vmem:[%s3 + $0xc8] sm:$0xff]
    %v97 = vld [vmem:[%s3 + $0xd0] sm:$0xff]
    %v98 = vld [vmem:[%s3 + $0xd8] sm:$0xff]
    %v99 = vld [vmem:[%s3 + $0xe0] sm:$0xff]
    %v100 = vld [vmem:[%s3 + $0xe8] sm:$0xff]
    %v101 = vld [vmem:[%s3 + $0xf0] sm:$0xff]
    %v102 = vld [vmem:[%s3 + $0xf8] sm:$0xff]
    %104 = vset.pattern.permute.xlu0 0
    %105 = vperm.xlu0 %104, %v71
    %v106 = vpop.permute.xlu0 %105
    %109 = vset.pattern.permute.xlu0 0
    %110 = vperm.xlu0 %109, %v72
    %v111 = vpop.permute.xlu0 %110
    %114 = vset.pattern.permute.xlu0 0
    %115 = vperm.xlu0 %114, %v73
    %v116 = vpop.permute.xlu0 %115
    %119 = vset.pattern.permute.xlu0 0
    %120 = vperm.xlu0 %119, %v74
    %v121 = vpop.permute.xlu0 %120
    %124 = vset.pattern.permute.xlu0 0
    %125 = vperm.xlu0 %124, %v75
    %v126 = vpop.permute.xlu0 %125
    %129 = vset.pattern.permute.xlu0 0
    %130 = vperm.xlu0 %129, %v76
    %v131 = vpop.permute.xlu0 %130
    %134 = vset.pattern.permute.xlu0 0
    %135 = vperm.xlu0 %134, %v77
    %v136 = vpop.permute.xlu0 %135
    %139 = vset.pattern.permute.xlu0 0
    %140 = vperm.xlu0 %139, %v78
    %v141 = vpop.permute.xlu0 %140
    %144 = vset.pattern.permute.xlu0 0
    %145 = vperm.xlu0 %144, %v79
    %v146 = vpop.permute.xlu0 %145
    %149 = vset.pattern.permute.xlu0 0
    %150 = vperm.xlu0 %149, %v80
    %v151 = vpop.permute.xlu0 %150
    %154 = vset.pattern.permute.xlu0 0
    %155 = vperm.xlu0 %154, %v81
    %v156 = vpop.permute.xlu0 %155
    %159 = vset.pattern.permute.xlu0 0
    %160 = vperm.xlu0 %159, %v82
    %v161 = vpop.permute.xlu0 %160
    %164 = vset.pattern.permute.xlu0 0
    %165 = vperm.xlu0 %164, %v83
    %v166 = vpop.permute.xlu0 %165
    %169 = vset.pattern.permute.xlu0 0
    %170 = vperm.xlu0 %169, %v84
    %v171 = vpop.permute.xlu0 %170
    %174 = vset.pattern.permute.xlu0 0
    %175 = vperm.xlu0 %174, %v85
    %v176 = vpop.permute.xlu0 %175
    %179 = vset.pattern.permute.xlu0 0
    %180 = vperm.xlu0 %179, %v86
    %v181 = vpop.permute.xlu0 %180
    %184 = vset.pattern.permute.xlu0 0
    %185 = vperm.xlu0 %184, %v87
    %v186 = vpop.permute.xlu0 %185
    %189 = vset.pattern.permute.xlu0 0
    %190 = vperm.xlu0 %189, %v88
    %v191 = vpop.permute.xlu0 %190
    %194 = vset.pattern.permute.xlu0 0
    %195 = vperm.xlu0 %194, %v89
    %v196 = vpop.permute.xlu0 %195
    %199 = vset.pattern.permute.xlu0 0
    %200 = vperm.xlu0 %199, %v90
    %v201 = vpop.permute.xlu0 %200
    %204 = vset.pattern.permute.xlu0 0
    %205 = vperm.xlu0 %204, %v91
    %v206 = vpop.permute.xlu0 %205
    %209 = vset.pattern.permute.xlu0 0
    %210 = vperm.xlu0 %209, %v92
    %v211 = vpop.permute.xlu0 %210
    %214 = vset.pattern.permute.xlu0 0
    %215 = vperm.xlu0 %214, %v93
    %v216 = vpop.permute.xlu0 %215
    %219 = vset.pattern.permute.xlu0 0
    %220 = vperm.xlu0 %219, %v94
    %v221 = vpop.permute.xlu0 %220
    %224 = vset.pattern.permute.xlu0 0
    %225 = vperm.xlu0 %224, %v95
    %v226 = vpop.permute.xlu0 %225
    %229 = vset.pattern.permute.xlu0 0
    %230 = vperm.xlu0 %229, %v96
    %v231 = vpop.permute.xlu0 %230
    %234 = vset.pattern.permute.xlu0 0
    %235 = vperm.xlu0 %234, %v97
    %v236 = vpop.permute.xlu0 %235
    %239 = vset.pattern.permute.xlu0 0
    %240 = vperm.xlu0 %239, %v98
    %v241 = vpop.permute.xlu0 %240
    %244 = vset.pattern.permute.xlu0 0
    %245 = vperm.xlu0 %244, %v99
    %v246 = vpop.permute.xlu0 %245
    %249 = vset.pattern.permute.xlu0 0
    %250 = vperm.xlu0 %249, %v100
    %v251 = vpop.permute.xlu0 %250
    %254 = vset.pattern.permute.xlu0 0
    %255 = vperm.xlu0 %254, %v101
    %v256 = vpop.permute.xlu0 %255
    %259 = vset.pattern.permute.xlu0 0
    %260 = vperm.xlu0 %259, %v102
    %v261 = vpop.permute.xlu0 %260
    %v295 = vunpack.c.l.b16 %v39
    %v296 = vunpack.c.h.b16 %v39
    %v297 = vunpack.c.l.b16 %v40
    %v298 = vunpack.c.h.b16 %v40
    %v299 = vunpack.c.l.b16 %v41
    %v300 = vunpack.c.h.b16 %v41
    %v301 = vunpack.c.l.b16 %v42
    %v302 = vunpack.c.h.b16 %v42
    %v303 = vunpack.c.l.b16 %v43
    %v304 = vunpack.c.h.b16 %v43
    %v305 = vunpack.c.l.b16 %v44
    %v306 = vunpack.c.h.b16 %v44
    %v307 = vunpack.c.l.b16 %v45
    %v308 = vunpack.c.h.b16 %v45
    %v309 = vunpack.c.l.b16 %v46
    %v310 = vunpack.c.h.b16 %v46
    %v311 = vunpack.c.l.b16 %v47
    %v312 = vunpack.c.h.b16 %v47
    %v313 = vunpack.c.l.b16 %v48
    %v314 = vunpack.c.h.b16 %v48
    %v315 = vunpack.c.l.b16 %v49
    %v316 = vunpack.c.h.b16 %v49
    %v317 = vunpack.c.l.b16 %v50
    %v318 = vunpack.c.h.b16 %v50
    %v319 = vunpack.c.l.b16 %v51
    %v320 = vunpack.c.h.b16 %v51
    %v321 = vunpack.c.l.b16 %v52
    %v322 = vunpack.c.h.b16 %v52
    %v323 = vunpack.c.l.b16 %v53
    %v324 = vunpack.c.h.b16 %v53
    %v325 = vunpack.c.l.b16 %v54
    %v326 = vunpack.c.h.b16 %v54
    %v327 = vunpack.c.l.b16 %v55
    %v328 = vunpack.c.h.b16 %v55
    %v329 = vunpack.c.l.b16 %v56
    %v330 = vunpack.c.h.b16 %v56
    %v331 = vunpack.c.l.b16 %v57
    %v332 = vunpack.c.h.b16 %v57
    %v333 = vunpack.c.l.b16 %v58
    %v334 = vunpack.c.h.b16 %v58
    %v335 = vunpack.c.l.b16 %v59
    %v336 = vunpack.c.h.b16 %v59
    %v337 = vunpack.c.l.b16 %v60
    %v338 = vunpack.c.h.b16 %v60
    %v339 = vunpack.c.l.b16 %v61
    %v340 = vunpack.c.h.b16 %v61
    %v341 = vunpack.c.l.b16 %v62
    %v342 = vunpack.c.h.b16 %v62
    %v343 = vunpack.c.l.b16 %v63
    %v344 = vunpack.c.h.b16 %v63
    %v345 = vunpack.c.l.b16 %v64
    %v346 = vunpack.c.h.b16 %v64
    %v347 = vunpack.c.l.b16 %v65
    %v348 = vunpack.c.h.b16 %v65
    %v349 = vunpack.c.l.b16 %v66
    %v350 = vunpack.c.h.b16 %v66
    %v351 = vunpack.c.l.b16 %v67
    %v352 = vunpack.c.h.b16 %v67
    %v353 = vunpack.c.l.b16 %v68
    %v354 = vunpack.c.h.b16 %v68
    %v355 = vunpack.c.l.b16 %v69
    %v356 = vunpack.c.h.b16 %v69
    %v357 = vunpack.c.l.b16 %v70
    %v358 = vunpack.c.h.b16 %v70
    %v359 = vpack.c.b16 %v297, %v295
    %v360 = vpack.c.b16 %v298, %v296
    %v361 = vpack.c.b16 %v301, %v299
    %v362 = vpack.c.b16 %v302, %v300
    %v363 = vpack.c.b16 %v305, %v303
    %v364 = vpack.c.b16 %v306, %v304
    %v365 = vpack.c.b16 %v309, %v307
    %v366 = vpack.c.b16 %v310, %v308
    %v367 = vpack.c.b16 %v313, %v311
    %v368 = vpack.c.b16 %v314, %v312
    %v369 = vpack.c.b16 %v317, %v315
    %v370 = vpack.c.b16 %v318, %v316
    %v371 = vpack.c.b16 %v321, %v319
    %v372 = vpack.c.b16 %v322, %v320
    %v373 = vpack.c.b16 %v325, %v323
    %v374 = vpack.c.b16 %v326, %v324
    %v375 = vpack.c.b16 %v329, %v327
    %v376 = vpack.c.b16 %v330, %v328
    %v377 = vpack.c.b16 %v333, %v331
    %v378 = vpack.c.b16 %v334, %v332
    %v379 = vpack.c.b16 %v337, %v335
    %v380 = vpack.c.b16 %v338, %v336
    %v381 = vpack.c.b16 %v341, %v339
    %v382 = vpack.c.b16 %v342, %v340
    %v383 = vpack.c.b16 %v345, %v343
    %v384 = vpack.c.b16 %v346, %v344
    %v385 = vpack.c.b16 %v349, %v347
    %v386 = vpack.c.b16 %v350, %v348
    %v387 = vpack.c.b16 %v353, %v351
    %v388 = vpack.c.b16 %v354, %v352
    %v389 = vpack.c.b16 %v357, %v355
    %v390 = vpack.c.b16 %v358, %v356
    %v424 = vunpack.c.l.b16 %v36
    %v425 = vunpack.c.h.b16 %v36
    %v426 = vpack.c.b16 %v424, %v424
    %v427 = vpack.c.b16 %v425, %v425
    %430 = vmatprep.subr.bf16.mxu0 %v427
    %431 = vmatpush1.bf16.xpose.msra.mxu0 %v426
    %432 = vmatprep.subr.bf16.mxu0 0
    %433 = vmatpush1.bf16.xpose.msra.mxu0 0
    %434 = vmatprep.subr.bf16.mxu0 0
    %435 = vmatpush1.bf16.xpose.msra.mxu0 0
    %436 = vmatprep.subr.bf16.mxu0 0
    %437 = vmatpush1.bf16.xpose.msra.mxu0 0
    %438 = vmatprep.subr.bf16.mxu0 0
    %439 = vmatpush1.bf16.xpose.msra.mxu0 0
    %440 = vmatprep.subr.bf16.mxu0 0
    %441 = vmatpush1.bf16.xpose.msra.mxu0 0
    %442 = vmatprep.subr.bf16.mxu0 0
    %443 = vmatpush1.bf16.xpose.msra.mxu0 0
    %444 = vmatprep.subr.bf16.mxu0 0
    %445 = vmatpush1.bf16.xpose.msra.mxu0 0
    %446 = vmatprep.subr.bf16.mxu0 0
    %447 = vmatpush1.bf16.xpose.msra.mxu0 0
    %448 = vmatprep.subr.bf16.mxu0 0
    %449 = vmatpush1.bf16.xpose.msra.mxu0 0
    %450 = vmatprep.subr.bf16.mxu0 0
    %451 = vmatpush1.bf16.xpose.msra.mxu0 0
    %452 = vmatprep.subr.bf16.mxu0 0
    %453 = vmatpush1.bf16.xpose.msra.mxu0 0
    %454 = vmatprep.subr.bf16.mxu0 0
    %455 = vmatpush1.bf16.xpose.msra.mxu0 0
    %456 = vmatprep.subr.bf16.mxu0 0
    %457 = vmatpush1.bf16.xpose.msra.mxu0 0
    %458 = vmatprep.subr.bf16.mxu0 0
    %459 = vmatpush1.bf16.xpose.msra.mxu0 0
    %460 = vmatprep.subr.bf16.mxu0 0
    %461 = vmatpush1.bf16.xpose.msra.mxu0 0
    %462 = vmatprep.mubr.bf16.mxu0 %v360
    %463 = vmatmul.mubr.bf16.gmra.mrb[0].mxu0 %v359
    %v464 = vpop.f32.mrb[0].mxu0
    %v465 = vadd.f32 %v106, %v464
    %v466 = vpop.f32.mrb[0].mxu0
    %v467 = vpop.f32.mrb[0].mxu0
    %v468 = vadd.f32 %v111, %v467
    %v469 = vpop.f32.mrb[0].mxu0
    %470 = vmatprep.mubr.bf16.mxu0 %v362
    %471 = vmatmul.mubr.bf16.gmra.mrb[0].mxu0 %v361
    %v472 = vpop.f32.mrb[0].mxu0
    %v473 = vadd.f32 %v116, %v472
    %v474 = vpop.f32.mrb[0].mxu0
    %v475 = vpop.f32.mrb[0].mxu0
    %v476 = vadd.f32 %v121, %v475
    %v477 = vpop.f32.mrb[0].mxu0
    %478 = vmatprep.mubr.bf16.mxu0 %v364
    %479 = vmatmul.mubr.bf16.gmra.mrb[0].mxu0 %v363
    %v480 = vpop.f32.mrb[0].mxu0
    %v481 = vadd.f32 %v126, %v480
    %v482 = vpop.f32.mrb[0].mxu0
    %v483 = vpop.f32.mrb[0].mxu0
    %v484 = vadd.f32 %v131, %v483
    %v485 = vpop.f32.mrb[0].mxu0
    %486 = vmatprep.mubr.bf16.mxu0 %v366
    %487 = vmatmul.mubr.bf16.gmra.mrb[0].mxu0 %v365
    %v488 = vpop.f32.mrb[0].mxu0
    %v489 = vadd.f32 %v136, %v488
    %v490 = vpop.f32.mrb[0].mxu0
    %v491 = vpop.f32.mrb[0].mxu0
    %v492 = vadd.f32 %v141, %v491
    %v493 = vpop.f32.mrb[0].mxu0
    %494 = vmatprep.mubr.bf16.mxu0 %v368
    %495 = vmatmul.mubr.bf16.gmra.mrb[0].mxu0 %v367
    %v496 = vpop.f32.mrb[0].mxu0
    %v497 = vadd.f32 %v146, %v496
    %v498 = vpop.f32.mrb[0].mxu0
    %v499 = vpop.f32.mrb[0].mxu0
    %v500 = vadd.f32 %v151, %v499
    %v501 = vpop.f32.mrb[0].mxu0
    %502 = vmatprep.mubr.bf16.mxu0 %v370
    %503 = vmatmul.mubr.bf16.gmra.mrb[0].mxu0 %v369
    %v504 = vpop.f32.mrb[0].mxu0
    %v505 = vadd.f32 %v156, %v504
    %v506 = vpop.f32.mrb[0].mxu0
    %v507 = vpop.f32.mrb[0].mxu0
    %v508 = vadd.f32 %v161, %v507
    %v509 = vpop.f32.mrb[0].mxu0
    %510 = vmatprep.mubr.bf16.mxu0 %v372
    %511 = vmatmul.mubr.bf16.gmra.mrb[0].mxu0 %v371
    %v512 = vpop.f32.mrb[0].mxu0
    %v513 = vadd.f32 %v166, %v512
    %v514 = vpop.f32.mrb[0].mxu0
    %v515 = vpop.f32.mrb[0].mxu0
    %v516 = vadd.f32 %v171, %v515
    %v517 = vpop.f32.mrb[0].mxu0
    %518 = vmatprep.mubr.bf16.mxu0 %v374
    %519 = vmatmul.mubr.bf16.gmra.mrb[0].mxu0 %v373
    %v520 = vpop.f32.mrb[0].mxu0
    %v521 = vadd.f32 %v176, %v520
    %v522 = vpop.f32.mrb[0].mxu0
    %v523 = vpop.f32.mrb[0].mxu0
    %v524 = vadd.f32 %v181, %v523
    %v525 = vpop.f32.mrb[0].mxu0
    %526 = vmatprep.mubr.bf16.mxu0 %v376
    %527 = vmatmul.mubr.bf16.gmra.mrb[0].mxu0 %v375
    %v528 = vpop.f32.mrb[0].mxu0
    %v529 = vadd.f32 %v186, %v528
    %v530 = vpop.f32.mrb[0].mxu0
    %v531 = vpop.f32.mrb[0].mxu0
    %v532 = vadd.f32 %v191, %v531
    %v533 = vpop.f32.mrb[0].mxu0
    %534 = vmatprep.mubr.bf16.mxu0 %v378
    %535 = vmatmul.mubr.bf16.gmra.mrb[0].mxu0 %v377
    %v536 = vpop.f32.mrb[0].mxu0
    %v537 = vadd.f32 %v196, %v536
    %v538 = vpop.f32.mrb[0].mxu0
    %v539 = vpop.f32.mrb[0].mxu0
    %v540 = vadd.f32 %v201, %v539
    %v541 = vpop.f32.mrb[0].mxu0
    %542 = vmatprep.mubr.bf16.mxu0 %v380
    %543 = vmatmul.mubr.bf16.gmra.mrb[0].mxu0 %v379
    %v544 = vpop.f32.mrb[0].mxu0
    %v545 = vadd.f32 %v206, %v544
    %v546 = vpop.f32.mrb[0].mxu0
    %v547 = vpop.f32.mrb[0].mxu0
    %v548 = vadd.f32 %v211, %v547
    %v549 = vpop.f32.mrb[0].mxu0
    %550 = vmatprep.mubr.bf16.mxu0 %v382
    %551 = vmatmul.mubr.bf16.gmra.mrb[0].mxu0 %v381
    %v552 = vpop.f32.mrb[0].mxu0
    %v553 = vadd.f32 %v216, %v552
    %v554 = vpop.f32.mrb[0].mxu0
    %v555 = vpop.f32.mrb[0].mxu0
    %v556 = vadd.f32 %v221, %v555
    %v557 = vpop.f32.mrb[0].mxu0
    %558 = vmatprep.mubr.bf16.mxu0 %v384
    %559 = vmatmul.mubr.bf16.gmra.mrb[0].mxu0 %v383
    %v560 = vpop.f32.mrb[0].mxu0
    %v561 = vadd.f32 %v226, %v560
    %v562 = vpop.f32.mrb[0].mxu0
    %v563 = vpop.f32.mrb[0].mxu0
    %v564 = vadd.f32 %v231, %v563
    %v565 = vpop.f32.mrb[0].mxu0
    %566 = vmatprep.mubr.bf16.mxu0 %v386
    %567 = vmatmul.mubr.bf16.gmra.mrb[0].mxu0 %v385
    %v568 = vpop.f32.mrb[0].mxu0
    %v569 = vadd.f32 %v236, %v568
    %v570 = vpop.f32.mrb[0].mxu0
    %v571 = vpop.f32.mrb[0].mxu0
    %v572 = vadd.f32 %v241, %v571
    %v573 = vpop.f32.mrb[0].mxu0
    %574 = vmatprep.mubr.bf16.mxu0 %v388
    %575 = vmatmul.mubr.bf16.gmra.mrb[0].mxu0 %v387
    %v576 = vpop.f32.mrb[0].mxu0
    %v577 = vadd.f32 %v246, %v576
    %v578 = vpop.f32.mrb[0].mxu0
    %v579 = vpop.f32.mrb[0].mxu0
    %v580 = vadd.f32 %v251, %v579
    %v581 = vpop.f32.mrb[0].mxu0
    %582 = vmatprep.mubr.bf16.mxu0 %v390
    %583 = vmatmul.mubr.bf16.gmra.mrb[0].mxu0 %v389
    %v584 = vpop.f32.mrb[0].mxu0
    %v585 = vadd.f32 %v256, %v584
    %v586 = vpop.f32.mrb[0].mxu0
    %v587 = vpop.f32.mrb[0].mxu0
    %v588 = vadd.f32 %v261, %v587
    %v589 = vpop.f32.mrb[0].mxu0
    %590 = vdwg.mxu0
    %v591 = vmax.f32 %v465, 0.0
    %v592 = vmax.f32 %v468, 0.0
    %v593 = vmax.f32 %v473, 0.0
    %v594 = vmax.f32 %v476, 0.0
    %v595 = vmax.f32 %v481, 0.0
    %v596 = vmax.f32 %v484, 0.0
    %v597 = vmax.f32 %v489, 0.0
    %v598 = vmax.f32 %v492, 0.0
    %v599 = vmax.f32 %v497, 0.0
    %v600 = vmax.f32 %v500, 0.0
    %v601 = vmax.f32 %v505, 0.0
    %v602 = vmax.f32 %v508, 0.0
    %v603 = vmax.f32 %v513, 0.0
    %v604 = vmax.f32 %v516, 0.0
    %v605 = vmax.f32 %v521, 0.0
    %v606 = vmax.f32 %v524, 0.0
    %v607 = vmax.f32 %v529, 0.0
    %v608 = vmax.f32 %v532, 0.0
    %v609 = vmax.f32 %v537, 0.0
    %v610 = vmax.f32 %v540, 0.0
    %v611 = vmax.f32 %v545, 0.0
    %v612 = vmax.f32 %v548, 0.0
    %v613 = vmax.f32 %v553, 0.0
    %v614 = vmax.f32 %v556, 0.0
    %v615 = vmax.f32 %v561, 0.0
    %v616 = vmax.f32 %v564, 0.0
    %v617 = vmax.f32 %v569, 0.0
    %v618 = vmax.f32 %v572, 0.0
    %v619 = vmax.f32 %v577, 0.0
    %v620 = vmax.f32 %v580, 0.0
    %v621 = vmax.f32 %v585, 0.0
    %v622 = vmax.f32 %v588, 0.0
    %v623 = vpack.c.bf16 %v592, %v591
    %v624 = vpack.c.bf16 %v594, %v593
    %v625 = vpack.c.bf16 %v596, %v595
    %v626 = vpack.c.bf16 %v598, %v597
    %v627 = vpack.c.bf16 %v600, %v599
    %v628 = vpack.c.bf16 %v602, %v601
    %v629 = vpack.c.bf16 %v604, %v603
    %v630 = vpack.c.bf16 %v606, %v605
    %v631 = vpack.c.bf16 %v608, %v607
    %v632 = vpack.c.bf16 %v610, %v609
    %v633 = vpack.c.bf16 %v612, %v611
    %v634 = vpack.c.bf16 %v614, %v613
    %v635 = vpack.c.bf16 %v616, %v615
    %v636 = vpack.c.bf16 %v618, %v617
    %v637 = vpack.c.bf16 %v620, %v619
    %v638 = vpack.c.bf16 %v622, %v621
    %v639 = vld [vmem:[%s4] sm:$0xff]
    %v640 = vld [vmem:[%s4 + $0x8] sm:$0xff]
    %v641 = vld [vmem:[%s4 + $0x10] sm:$0xff]
    %v642 = vld [vmem:[%s4 + $0x18] sm:$0xff]
    %v643 = vld [vmem:[%s4 + $0x20] sm:$0xff]
    %v644 = vld [vmem:[%s4 + $0x28] sm:$0xff]
    %v645 = vld [vmem:[%s4 + $0x30] sm:$0xff]
    %v646 = vld [vmem:[%s4 + $0x38] sm:$0xff]
    %v647 = vld [vmem:[%s4 + $0x40] sm:$0xff]
    %v648 = vld [vmem:[%s5] sm:$0xff]
    %v649 = vld [vmem:[%s5 + $0x8] sm:$0xff]
    %v650 = vld [vmem:[%s5 + $0x10] sm:$0xff]
    %v651 = vld [vmem:[%s5 + $0x18] sm:$0xff]
    %v652 = vld [vmem:[%s5 + $0x20] sm:$0xff]
    %v653 = vld [vmem:[%s5 + $0x28] sm:$0xff]
    %v654 = vld [vmem:[%s5 + $0x30] sm:$0xff]
    %v655 = vld [vmem:[%s5 + $0x38] sm:$0xff]
    %v656 = vld [vmem:[%s5 + $0x40] sm:$0xff]
    %658 = vset.pattern.permute.xlu0 0
    %659 = vperm.xlu0 %658, %v648
    %v660 = vpop.permute.xlu0 %659
    %663 = vset.pattern.permute.xlu0 0
    %664 = vperm.xlu0 %663, %v649
    %v665 = vpop.permute.xlu0 %664
    %668 = vset.pattern.permute.xlu0 0
    %669 = vperm.xlu0 %668, %v650
    %v670 = vpop.permute.xlu0 %669
    %673 = vset.pattern.permute.xlu0 0
    %674 = vperm.xlu0 %673, %v651
    %v675 = vpop.permute.xlu0 %674
    %678 = vset.pattern.permute.xlu0 0
    %679 = vperm.xlu0 %678, %v652
    %v680 = vpop.permute.xlu0 %679
    %683 = vset.pattern.permute.xlu0 0
    %684 = vperm.xlu0 %683, %v653
    %v685 = vpop.permute.xlu0 %684
    %688 = vset.pattern.permute.xlu0 0
    %689 = vperm.xlu0 %688, %v654
    %v690 = vpop.permute.xlu0 %689
    %693 = vset.pattern.permute.xlu0 0
    %694 = vperm.xlu0 %693, %v655
    %v695 = vpop.permute.xlu0 %694
    %698 = vset.pattern.permute.xlu0 0
    %699 = vperm.xlu0 %698, %v656
    %v700 = vpop.permute.xlu0 %699
    %v711 = vunpack.c.l.b16 %v639
    %v712 = vunpack.c.h.b16 %v639
    %v713 = vunpack.c.l.b16 %v640
    %v714 = vunpack.c.h.b16 %v640
    %v715 = vunpack.c.l.b16 %v641
    %v716 = vunpack.c.h.b16 %v641
    %v717 = vunpack.c.l.b16 %v642
    %v718 = vunpack.c.h.b16 %v642
    %v719 = vunpack.c.l.b16 %v643
    %v720 = vunpack.c.h.b16 %v643
    %v721 = vunpack.c.l.b16 %v644
    %v722 = vunpack.c.h.b16 %v644
    %v723 = vunpack.c.l.b16 %v645
    %v724 = vunpack.c.h.b16 %v645
    %v725 = vunpack.c.l.b16 %v646
    %v726 = vunpack.c.h.b16 %v646
    %v727 = vunpack.c.l.b16 %v647
    %v728 = vunpack.c.h.b16 %v647
    %v729 = vpack.c.b16 %v713, %v711
    %v730 = vpack.c.b16 %v714, %v712
    %v731 = vpack.c.b16 %v717, %v715
    %v732 = vpack.c.b16 %v718, %v716
    %v733 = vpack.c.b16 %v721, %v719
    %v734 = vpack.c.b16 %v722, %v720
    %v735 = vpack.c.b16 %v725, %v723
    %v736 = vpack.c.b16 %v726, %v724
    %v737 = vpack.c.b16 %v727, %v727
    %v738 = vpack.c.b16 %v728, %v728
    %749 = vmatprep.subr.bf16.mxu0 0
    %750 = vmatpush1.bf16.msra.mxu0 %v623
    %751 = vmatprep.subr.bf16.mxu0 0
    %752 = vmatpush1.bf16.msra.mxu0 %v624
    %753 = vmatprep.subr.bf16.mxu0 0
    %754 = vmatpush1.bf16.msra.mxu0 %v625
    %755 = vmatprep.subr.bf16.mxu0 0
    %756 = vmatpush1.bf16.msra.mxu0 %v626
    %757 = vmatprep.subr.bf16.mxu0 0
    %758 = vmatpush1.bf16.msra.mxu0 %v627
    %759 = vmatprep.subr.bf16.mxu0 0
    %760 = vmatpush1.bf16.msra.mxu0 %v628
    %761 = vmatprep.subr.bf16.mxu0 0
    %762 = vmatpush1.bf16.msra.mxu0 %v629
    %763 = vmatprep.subr.bf16.mxu0 0
    %764 = vmatpush1.bf16.msra.mxu0 %v630
    %765 = vmatprep.subr.bf16.mxu0 0
    %766 = vmatpush1.bf16.msra.mxu0 %v631
    %767 = vmatprep.subr.bf16.mxu0 0
    %768 = vmatpush1.bf16.msra.mxu0 %v632
    %769 = vmatprep.subr.bf16.mxu0 0
    %770 = vmatpush1.bf16.msra.mxu0 %v633
    %771 = vmatprep.subr.bf16.mxu0 0
    %772 = vmatpush1.bf16.msra.mxu0 %v634
    %773 = vmatprep.subr.bf16.mxu0 0
    %774 = vmatpush1.bf16.msra.mxu0 %v635
    %775 = vmatprep.subr.bf16.mxu0 0
    %776 = vmatpush1.bf16.msra.mxu0 %v636
    %777 = vmatprep.subr.bf16.mxu0 0
    %778 = vmatpush1.bf16.msra.mxu0 %v637
    %779 = vmatprep.subr.bf16.mxu0 0
    %780 = vmatpush1.bf16.msra.mxu0 %v638
    %781 = vmatprep.mubr.bf16.mxu0 %v730
    %782 = vmatmul.mubr.bf16.gmra.mrb[0].mxu0 %v729
    %v783 = vpop.f32.mrb[0].mxu0
    %v784 = vadd.f32 %v660, %v783
    %v785 = vpop.f32.mrb[0].mxu0
    %v786 = vpop.f32.mrb[0].mxu0
    %v787 = vadd.f32 %v665, %v786
    %v788 = vpop.f32.mrb[0].mxu0
    %789 = vmatprep.mubr.bf16.mxu0 %v732
    %790 = vmatmul.mubr.bf16.gmra.mrb[0].mxu0 %v731
    %v791 = vpop.f32.mrb[0].mxu0
    %v792 = vadd.f32 %v670, %v791
    %v793 = vpop.f32.mrb[0].mxu0
    %v794 = vpop.f32.mrb[0].mxu0
    %v795 = vadd.f32 %v675, %v794
    %v796 = vpop.f32.mrb[0].mxu0
    %797 = vmatprep.mubr.bf16.mxu0 %v734
    %798 = vmatmul.mubr.bf16.gmra.mrb[0].mxu0 %v733
    %v799 = vpop.f32.mrb[0].mxu0
    %v800 = vadd.f32 %v680, %v799
    %v801 = vpop.f32.mrb[0].mxu0
    %v802 = vpop.f32.mrb[0].mxu0
    %v803 = vadd.f32 %v685, %v802
    %v804 = vpop.f32.mrb[0].mxu0
    %805 = vmatprep.mubr.bf16.mxu0 %v736
    %806 = vmatmul.mubr.bf16.gmra.mrb[0].mxu0 %v735
    %v807 = vpop.f32.mrb[0].mxu0
    %v808 = vadd.f32 %v690, %v807
    %v809 = vpop.f32.mrb[0].mxu0
    %v810 = vpop.f32.mrb[0].mxu0
    %v811 = vadd.f32 %v695, %v810
    %v812 = vpop.f32.mrb[0].mxu0
    %813 = vmatprep.mubr.bf16.mxu0 %v738
    %814 = vmatmul.mubr.bf16.gmra.mrb[0].mxu0 %v737
    %v815 = vpop.f32.mrb[0].mxu0
    %v816 = vadd.f32 %v700, %v815
    %v817 = vpop.f32.mrb[0].mxu0
    %v818 = vpop.f32.mrb[0].mxu0
    %v819 = vpop.f32.mrb[0].mxu0
    %820 = vdwg.mxu0
    %v821 = vmul.f32 %v784, %v38
    %v822 = vmul.f32 %v787, %v38
    %v823 = vmul.f32 %v792, %v38
    %v824 = vmul.f32 %v795, %v38
    %v825 = vmul.f32 %v800, %v38
    %v826 = vmul.f32 %v803, %v38
    %v827 = vmul.f32 %v808, %v38
    %v828 = vmul.f32 %v811, %v38
    %v829 = vmul.f32 %v816, %v38
    %v830 = vmul.f32 %v824, %v824
    %v831 = vmul.f32 %v825, %v825
    %v832 = vadd.f32 %v830, %v831
    %v833 = vmul.f32 %v826, %v826
    %v834 = vadd.f32 %v832, %v833
    %v835 = vmax.f32 %v834, 1e-24
    %v836 = vrsqrt.pop %v835
    %v837 = vmul.f32 %v824, %v836
    %v838 = vmul.f32 %v825, %v836
    %v839 = vmul.f32 %v826, %v836
    %v840 = vmul.f32 %v827, %v837
    %v841 = vmul.f32 %v828, %v838
    %v842 = vadd.f32 %v840, %v841
    %v843 = vmul.f32 %v829, %v839
    %v844 = vadd.f32 %v842, %v843
    %v845 = vmul.f32 %v844, %v837
    %v846 = vsub.f32 %v827, %v845
    %v847 = vmul.f32 %v844, %v838
    %v848 = vsub.f32 %v828, %v847
    %v849 = vmul.f32 %v844, %v839
    %v850 = vsub.f32 %v829, %v849
    %v851 = vmul.f32 %v846, %v846
    %v852 = vmul.f32 %v848, %v848
    %v853 = vadd.f32 %v851, %v852
    %v854 = vmul.f32 %v850, %v850
    %v855 = vadd.f32 %v853, %v854
    %v856 = vmax.f32 %v855, 1e-24
    %v857 = vrsqrt.pop %v856
    %v858 = vmul.f32 %v846, %v857
    %v859 = vmul.f32 %v848, %v857
    %v860 = vmul.f32 %v850, %v857
    %v861 = vmul.f32 %v838, %v860
    %v862 = vmul.f32 %v839, %v859
    %v863 = vsub.f32 %v861, %v862
    %v864 = vmul.f32 %v839, %v858
    %v865 = vmul.f32 %v837, %v860
    %v866 = vsub.f32 %v864, %v865
    %v867 = vmul.f32 %v837, %v859
    %v868 = vmul.f32 %v838, %v858
    %v869 = vsub.f32 %v867, %v868
    %vm870 = vcmask 64512
    %871 = vst.msk [vmem:[%s6] sm:$0xff] %vm870, %v821
    %872 = vst.msk [vmem:[%s6 + $0x8] sm:$0xff] %vm870, %v822
    %873 = vst.msk [vmem:[%s6 + $0x10] sm:$0xff] %vm870, %v823
    %874 = vst.msk [vmem:[%s6 + $0x18] sm:$0xff] %vm870, %v837
    %875 = vst.msk [vmem:[%s6 + $0x20] sm:$0xff] %vm870, %v838
    %876 = vst.msk [vmem:[%s6 + $0x28] sm:$0xff] %vm870, %v839
    %877 = vst.msk [vmem:[%s6 + $0x30] sm:$0xff] %vm870, %v858
    %878 = vst.msk [vmem:[%s6 + $0x38] sm:$0xff] %vm870, %v859
    %879 = vst.msk [vmem:[%s6 + $0x40] sm:$0xff] %vm870, %v860
    %880 = vst.msk [vmem:[%s6 + $0x48] sm:$0xff] %vm870, %v863
    %881 = vst.msk [vmem:[%s6 + $0x50] sm:$0xff] %vm870, %v866
    %882 = vst.msk [vmem:[%s6 + $0x58] sm:$0xff] %vm870, %v869
    // Predicated region
    $region30: #{tpu_custom_call.1} parent=1 // pred_check
      _
    $region31: #{tpu_custom_call.1} parent=1 // pred_check_branch
      %884 = sbr.rel (0) target = $region33
    $region32: #{tpu_custom_call.1} parent=1 // pred_region
      _
    $region33: #{tpu_custom_call.1} parent=1 // pred_fallthru
      _
    // Predicated region
    $region34: #{tpu_custom_call.1} parent=1 // pred_check
      _
    $region35: #{tpu_custom_call.1} parent=1 // pred_check_branch
      %886 = sbr.rel (0) target = $region37
    $region36: #{tpu_custom_call.1} parent=1 // pred_region
      _
    $region37: #{tpu_custom_call.1} parent=1 // pred_fallthru
      _
    %887 = vsyncpa [#allocation3], 1

</llo_original>
